<compile_context>
chip_gen: v6e
topology: v6e:2x2x1
jax: 0.10.0
libtpu: 0.0.40
codegen_flags: <defaults>
</compile_context>

<pallas_src>
import jax
import jax.numpy as jnp
from jax.experimental import pallas as pl
from jax.experimental.pallas import tpu as pltpu


def _hbm_copy_kernel(x_hbm_ref, o_hbm_ref, copy_sem):
    """Copy the whole flat input slab to the output with one HBM->HBM DMA.

    No VMEM buffers, no vreg traffic: the DMA engine moves the bytes at HBM
    bandwidth while the TensorCore stays idle.  This is insensitive to the
    per-core VMEM size (64 MiB on v7x vs 128 MiB on v5e/v6e).
    """
    copy = pltpu.make_async_copy(x_hbm_ref, o_hbm_ref, copy_sem)
    copy.start()
    copy.wait()


def reshape_pallas(x: jax.Array, img_shape: tuple[int, ...]) -> jax.Array:
    """Equivalent of Reshape(img_shape)(x): x.view((N, *img_shape))."""
    n = x.shape[0]
    feat = 1
    for d in img_shape:
        feat *= d

    # Accept any trailing layout whose element count matches (like torch.view);
    # flattening to (N, F) is metadata-only.
    trailing = 1
    for d in x.shape[1:]:
        trailing *= d
    assert trailing == feat, f"cannot view {x.shape} as {(n, *img_shape)}"
    x_flat = x.reshape((n, feat))

    # Mandated Pallas kernel: one direct HBM->HBM DMA of the flat slab.
    flat_out = pl.pallas_call(
        _hbm_copy_kernel,
        out_shape=jax.ShapeDtypeStruct((n, feat), x.dtype),
        in_specs=[pl.BlockSpec(memory_space=pl.ANY)],   # raw HBM ref, no auto-DMA
        out_specs=pl.BlockSpec(memory_space=pl.ANY),    # raw HBM ref, written by DMA
        scratch_shapes=[pltpu.SemaphoreType.DMA],
    )(x_flat)

    # Metadata-only view change to (N, *img_shape); XLA emits no extra copy.
    return flat_out.reshape((n,) + tuple(img_shape))


if __name__ == "__main__":
    img_shape = (4, 16, 16)          # (C, H, W)
    batch = 2
    feat = 4 * 16 * 16               # 1024 flat features per example

    key = jax.random.PRNGKey(0)
    x = jax.random.normal(key, (batch, feat), dtype=jnp.float32)

    out = jax.block_until_ready(reshape_pallas(x, img_shape))

    # Verify against the pure-JAX reference of torch's x.view((N, *img_shape)).
    ref = x.reshape((batch,) + img_shape)
    assert out.shape == (batch,) + img_shape, out.shape
    assert out.dtype == x.dtype
    assert jnp.array_equal(out, ref)

    print("KERNEL_OK")
</pallas_src>

<mosaic_0001>
module attributes {stable_mosaic.version = 11 : i64} {
  func.func @_hbm_copy_kernel(%arg0: memref<2x1024xf32, #tpu.memory_space<any>>, %arg1: memref<2x1024xf32, #tpu.memory_space<any>>, %arg2: memref<!tpu.dma_semaphore, #tpu.memory_space<semaphore_mem>>) attributes {dimension_semantics = [], scalar_prefetch = 0 : i64, scratch_operands = 1 : i64, tpu.core_type = #tpu.core_type<tc>} {
    tpu.enqueue_dma source(%arg0 : memref<2x1024xf32, #tpu.memory_space<any>>) target(%arg1 : memref<2x1024xf32, #tpu.memory_space<any>>) target_semaphore(%arg2 : memref<!tpu.dma_semaphore, #tpu.memory_space<semaphore_mem>>)
    tpu.wait_dma2 semaphore(%arg2 : memref<!tpu.dma_semaphore, #tpu.memory_space<semaphore_mem>>) src(%arg0 : memref<2x1024xf32, #tpu.memory_space<any>>) dst(%arg1 : memref<2x1024xf32, #tpu.memory_space<any>>)
    return
  }
}

</mosaic_0001>

<llo_original>
// kernel: tpu_custom_call.1
$region0: #{tpu_custom_call.1}
  #allocation0 [shape = 'u32[]', space=smem, size = 0x4, offset = 0x4, fixed_abs, tag = 'smem constant byte address 0x4 - core index']
  #allocation1 [shape = 'u32[144,128]{1,0:T(1,128)}', space=vmem, size = 0x12000, scoped, tag = 'internal scratch']
  #allocation2 [shape = 's32[1]{0}', space=sflag, size = 0x4, scoped, tag = 'scratch operand']
  #allocation3 [shape = 's32[]', space=sflag, size = 0x4, offset = 0, fixed_abs, tag = 'sflag constant byte address 0x0 - dummy sync flag']
  #allocation4 [shape = 'u32[0]{0}', space=smem, size = 0, offset = 0, fixed_abs, tag = 'smem constant byte address 0x0 - null']
  %s0 = inlined_call_operand.hbm [shape: f32[2,1024], index: 0, kind: input, shape index: {}]
  %s1 = inlined_call_operand.hbm [shape: f32[2,1024], index: 1, kind: output, shape index: {}]
  %s2 = sld [smem:[#allocation0]]
  $region2: #{tpu_custom_call.1} parent=0
    _
  %s4 = ssub.s32 1, %s2
  %s5 = scalar_select 0, %s4, %s2
  %s7 = sshll.u32 1, 14
  %s8 = sxor.u32 4294967295, %s7
  %12 = dma.general %s0, 256, %s1, [#allocation2], 131072, [#allocation4], 0, 0
  %s13 = smul.u32 2, 1
  %s14 = smul.u32 %s13, 8
  %s15 = sshll.u32 %s14, 4
  %16 = dma.done [#allocation2], %s15
  %17 = vsyncmov [#allocation2]
  %s18 = vpop.sfrf %17
  %p19 = scmp.eq.s32.totalorder %s18, 0
  %p20 = pneg %p19
  %22 = shalt.err (%p20)

</llo_original>
